<compile_context>
chip_gen: v7x
topology: tpu7x:2x2x1
jax: 0.10.0
libtpu: 0.0.40
codegen_flags: <defaults>
</compile_context>

<pallas_src>
import functools

import jax
import jax.numpy as jnp
import numpy as np
from jax.experimental import pallas as pl
from jax.experimental.pallas import tpu as pltpu


def _smh_kernel(q_ref, k_ref, v_ref,
                wqt_ref, wkt_ref, wvt_ref,
                bq_ref, bk_ref, bv_ref,
                o_ref, *, B, S, E):
    f32 = jnp.float32

    q2 = q_ref[...].astype(f32)      # (B*S, E)
    k2 = k_ref[...].astype(f32)
    v2 = v_ref[...].astype(f32)
    wqt = wqt_ref[...].astype(f32)   # (E, E) = Wq.T (in, out) -- pre-transposed in wrapper
    wkt = wkt_ref[...].astype(f32)
    wvt = wvt_ref[...].astype(f32)
    bq = bq_ref[...].astype(f32)     # (1, E) row broadcast
    bk = bk_ref[...].astype(f32)
    bv = bv_ref[...].astype(f32)

    # nn.Linear: y = x @ W.T + b   (W.T already applied outside the kernel)
    Qp = jnp.dot(q2, wqt, preferred_element_type=f32) + bq
    Kp = jnp.dot(k2, wkt, preferred_element_type=f32) + bk
    Vp = jnp.dot(v2, wvt, preferred_element_type=f32) + bv

    # Fold the 1/E score scaling into Qp instead of scaling the full scores tensor.
    Qp = Qp * f32(1.0 / E)

    Qp3 = Qp.reshape(B, S, E)
    Kp3 = Kp.reshape(B, S, E)
    Vp3 = Vp.reshape(B, S, E)

    # scores = (Qp / E) @ Kp^T   -> (B, Sq, Sk)
    scores = jnp.einsum('bqe,bke->bqk', Qp3, Kp3, preferred_element_type=f32)

    # F.softmax(..., dim=0): softmax across the BATCH dimension (PyTorch quirk preserved).
    m = jnp.max(scores, axis=0, keepdims=True)
    p = jnp.exp(scores - m)
    denom = jnp.sum(p, axis=0, keepdims=True)
    attn = p * pl.reciprocal(denom, approx=False)   # exact, keeps 1e-5 tolerance

    # attn @ Vp  -> (B, Sq, E)
    out = jnp.einsum('bqk,bke->bqe', attn, Vp3, preferred_element_type=f32)

    # Lane-dense store: last dim S*E is a multiple of 128 lanes -> unmasked vst.
    o_ref[...] = out.reshape(B, S * E).astype(o_ref.dtype)


def single_multi_head(q, k, v, wq, wk, wv, bq, bk, bv):
    B, S, E = q.shape

    # Flatten activations to 2D so each projection is a single (B*S, E) @ (E, E) matmul.
    q2 = q.reshape(B * S, E)
    k2 = k.reshape(B * S, E)
    v2 = v.reshape(B * S, E)

    # Pre-transpose weights outside the kernel (free XLA-side layout change).
    wqt, wkt, wvt = wq.T, wk.T, wv.T
    bq2, bk2, bv2 = bq.reshape(1, E), bk.reshape(1, E), bv.reshape(1, E)

    vmem = pl.BlockSpec(memory_space=pltpu.MemorySpace.VMEM)

    out2d = pl.pallas_call(
        functools.partial(_smh_kernel, B=B, S=S, E=E),
        out_shape=jax.ShapeDtypeStruct((B, S * E), q.dtype),
        in_specs=[vmem] * 9,
        out_specs=vmem,
    )(q2, k2, v2, wqt, wkt, wvt, bq2, bk2, bv2)

    # Free reshape back to the module's (B, S, E) layout, outside the kernel.
    return out2d.reshape(B, S, E)


def _reference(q, k, v, wq, wk, wv, bq, bk, bv):
    Qp = jnp.einsum('bse,fe->bsf', q, wq) + bq
    Kp = jnp.einsum('bse,fe->bsf', k, wk) + bk
    Vp = jnp.einsum('bse,fe->bsf', v, wv) + bv
    scores = jnp.einsum('bqe,bke->bqk', Qp, Kp) / Kp.shape[2]
    attn = jax.nn.softmax(scores, axis=0)   # dim=0, matching the PyTorch quirk
    return jnp.einsum('bqk,bke->bqe', attn, Vp)


if __name__ == "__main__":
    B, S, E = 2, 8, 32   # batch, seq, emd_shape
    key = jax.random.PRNGKey(0)
    ks = jax.random.split(key, 9)

    q = jax.random.normal(ks[0], (B, S, E), dtype=jnp.float32)
    k = jax.random.normal(ks[1], (B, S, E), dtype=jnp.float32)
    v = jax.random.normal(ks[2], (B, S, E), dtype=jnp.float32)

    # Deterministic parameter init (nn.Linear shapes, uniform(-1/sqrt(E), 1/sqrt(E)))
    bound = 1.0 / np.sqrt(E)
    wq = jax.random.uniform(ks[3], (E, E), minval=-bound, maxval=bound, dtype=jnp.float32)
    wk = jax.random.uniform(ks[4], (E, E), minval=-bound, maxval=bound, dtype=jnp.float32)
    wv = jax.random.uniform(ks[5], (E, E), minval=-bound, maxval=bound, dtype=jnp.float32)
    bq = jax.random.uniform(ks[6], (E,), minval=-bound, maxval=bound, dtype=jnp.float32)
    bk = jax.random.uniform(ks[7], (E,), minval=-bound, maxval=bound, dtype=jnp.float32)
    bv = jax.random.uniform(ks[8], (E,), minval=-bound, maxval=bound, dtype=jnp.float32)

    out = single_multi_head(q, k, v, wq, wk, wv, bq, bk, bv)
    out = jax.block_until_ready(out)

    ref = _reference(q, k, v, wq, wk, wv, bq, bk, bv)
    np.testing.assert_allclose(np.asarray(out), np.asarray(ref), rtol=1e-5, atol=1e-5)

    print("KERNEL_OK")
</pallas_src>

<mosaic_0001>
module attributes {stable_mosaic.version = 11 : i64} {
  func.func @_smh_kernel(%arg0: memref<16x32xf32, #tpu.memory_space<vmem>>, %arg1: memref<16x32xf32, #tpu.memory_space<vmem>>, %arg2: memref<16x32xf32, #tpu.memory_space<vmem>>, %arg3: memref<32x32xf32, #tpu.memory_space<vmem>>, %arg4: memref<32x32xf32, #tpu.memory_space<vmem>>, %arg5: memref<32x32xf32, #tpu.memory_space<vmem>>, %arg6: memref<1x32xf32, #tpu.memory_space<vmem>>, %arg7: memref<1x32xf32, #tpu.memory_space<vmem>>, %arg8: memref<1x32xf32, #tpu.memory_space<vmem>>, %arg9: memref<2x256xf32, #tpu.memory_space<vmem>>) attributes {dimension_semantics = [], scalar_prefetch = 0 : i64, scratch_operands = 0 : i64, tpu.core_type = #tpu.core_type<tc>} {
    %c0 = arith.constant 0 : index
    %c0_0 = arith.constant 0 : index
    %0 = vector.load %arg0[%c0, %c0_0] : memref<16x32xf32, #tpu.memory_space<vmem>>, vector<16x32xf32>
    %c0_1 = arith.constant 0 : index
    %c0_2 = arith.constant 0 : index
    %1 = vector.load %arg1[%c0_1, %c0_2] : memref<16x32xf32, #tpu.memory_space<vmem>>, vector<16x32xf32>
    %c0_3 = arith.constant 0 : index
    %c0_4 = arith.constant 0 : index
    %2 = vector.load %arg2[%c0_3, %c0_4] : memref<16x32xf32, #tpu.memory_space<vmem>>, vector<16x32xf32>
    %c0_5 = arith.constant 0 : index
    %c0_6 = arith.constant 0 : index
    %3 = vector.load %arg3[%c0_5, %c0_6] : memref<32x32xf32, #tpu.memory_space<vmem>>, vector<32x32xf32>
    %c0_7 = arith.constant 0 : index
    %c0_8 = arith.constant 0 : index
    %4 = vector.load %arg4[%c0_7, %c0_8] : memref<32x32xf32, #tpu.memory_space<vmem>>, vector<32x32xf32>
    %c0_9 = arith.constant 0 : index
    %c0_10 = arith.constant 0 : index
    %5 = vector.load %arg5[%c0_9, %c0_10] : memref<32x32xf32, #tpu.memory_space<vmem>>, vector<32x32xf32>
    %c0_11 = arith.constant 0 : index
    %c0_12 = arith.constant 0 : index
    %6 = vector.load %arg6[%c0_11, %c0_12] : memref<1x32xf32, #tpu.memory_space<vmem>>, vector<1x32xf32>
    %c0_13 = arith.constant 0 : index
    %c0_14 = arith.constant 0 : index
    %7 = vector.load %arg7[%c0_13, %c0_14] : memref<1x32xf32, #tpu.memory_space<vmem>>, vector<1x32xf32>
    %c0_15 = arith.constant 0 : index
    %c0_16 = arith.constant 0 : index
    %8 = vector.load %arg8[%c0_15, %c0_16] : memref<1x32xf32, #tpu.memory_space<vmem>>, vector<1x32xf32>
    %cst = arith.constant dense<0.000000e+00> : vector<16x32xf32>
    %9 = tpu.matmul %0, %3, %cst {dimension_numbers = #tpu.dot_dimension_numbers<[1], [0], [0], [1], [0, 0, 1, 1], [], []>} : vector<16x32xf32>, vector<32x32xf32>, vector<16x32xf32> -> vector<16x32xf32>
    %10 = vector.broadcast %6 : vector<1x32xf32> to vector<16x32xf32>
    %11 = arith.addf %9, %10 : vector<16x32xf32>
    %cst_17 = arith.constant dense<0.000000e+00> : vector<16x32xf32>
    %12 = tpu.matmul %1, %4, %cst_17 {dimension_numbers = #tpu.dot_dimension_numbers<[1], [0], [0], [1], [0, 0, 1, 1], [], []>} : vector<16x32xf32>, vector<32x32xf32>, vector<16x32xf32> -> vector<16x32xf32>
    %13 = vector.broadcast %7 : vector<1x32xf32> to vector<16x32xf32>
    %14 = arith.addf %12, %13 : vector<16x32xf32>
    %cst_18 = arith.constant dense<0.000000e+00> : vector<16x32xf32>
    %15 = tpu.matmul %2, %5, %cst_18 {dimension_numbers = #tpu.dot_dimension_numbers<[1], [0], [0], [1], [0, 0, 1, 1], [], []>} : vector<16x32xf32>, vector<32x32xf32>, vector<16x32xf32> -> vector<16x32xf32>
    %16 = vector.broadcast %8 : vector<1x32xf32> to vector<16x32xf32>
    %17 = arith.addf %15, %16 : vector<16x32xf32>
    %cst_19 = arith.constant 3.125000e-02 : f32
    %18 = vector.broadcast %cst_19 : f32 to vector<16x32xf32>
    %19 = arith.mulf %11, %18 : vector<16x32xf32>
    %20 = vector.shape_cast %19 : vector<16x32xf32> to vector<2x8x32xf32>
    %21 = vector.shape_cast %14 : vector<16x32xf32> to vector<2x8x32xf32>
    %22 = vector.shape_cast %17 : vector<16x32xf32> to vector<2x8x32xf32>
    "tpu.trace_start"() <{level = 10 : i32, message = "bqe,bke->bqk"}> : () -> ()
    %cst_20 = arith.constant dense<0.000000e+00> : vector<2x8x8xf32>
    %23 = tpu.matmul %20, %21, %cst_20 {dimension_numbers = #tpu.dot_dimension_numbers<[2], [2], [1], [1], [0, 0, 0, 1, 1, 1], [0], [0]>} : vector<2x8x32xf32>, vector<2x8x32xf32>, vector<2x8x8xf32> -> vector<2x8x8xf32>
    "tpu.trace_stop"() : () -> ()
    %cst_21 = arith.constant dense<0xFF800000> : vector<8x8xf32>
    %24 = vector.multi_reduction <maximumf>, %23, %cst_21 [0] : vector<2x8x8xf32> to vector<8x8xf32>
    %25 = vector.shape_cast %24 : vector<8x8xf32> to vector<1x8x8xf32>
    %26 = vector.broadcast %25 : vector<1x8x8xf32> to vector<2x8x8xf32>
    %27 = arith.subf %23, %26 : vector<2x8x8xf32>
    %28 = math.exp %27 : vector<2x8x8xf32>
    %cst_22 = arith.constant dense<0.000000e+00> : vector<8x8xf32>
    %29 = vector.multi_reduction <add>, %28, %cst_22 [0] : vector<2x8x8xf32> to vector<8x8xf32>
    %30 = vector.shape_cast %29 : vector<8x8xf32> to vector<1x8x8xf32>
    %31 = tpu.reciprocal %30 : vector<1x8x8xf32> -> vector<1x8x8xf32>
    %32 = vector.broadcast %31 : vector<1x8x8xf32> to vector<2x8x8xf32>
    %33 = arith.mulf %28, %32 : vector<2x8x8xf32>
    "tpu.trace_start"() <{level = 10 : i32, message = "bqk,bke->bqe"}> : () -> ()
    %cst_23 = arith.constant dense<0.000000e+00> : vector<2x8x32xf32>
    %34 = tpu.matmul %33, %22, %cst_23 {dimension_numbers = #tpu.dot_dimension_numbers<[2], [1], [1], [2], [0, 0, 0, 1, 1, 2], [0], [0]>} : vector<2x8x8xf32>, vector<2x8x32xf32>, vector<2x8x32xf32> -> vector<2x8x32xf32>
    "tpu.trace_stop"() : () -> ()
    %35 = vector.shape_cast %34 : vector<2x8x32xf32> to vector<2x256xf32>
    %c0_24 = arith.constant 0 : index
    %c0_25 = arith.constant 0 : index
    %36 = vector.load %arg9[%c0_24, %c0_25] : memref<2x256xf32, #tpu.memory_space<vmem>>, vector<2x256xf32>
    tpu.vector_store %arg9[%c0_24, %c0_25], %35 {strides = array<i32>} : memref<2x256xf32, #tpu.memory_space<vmem>>, vector<2x256xf32>,
    return
  }
}

</mosaic_0001>

<llo_original>
// kernel: tpu_custom_call.1
$region0: #{tpu_custom_call.1}
  #allocation0 [shape = 'u32[]', space=smem, size = 0x4, offset = 0x4, fixed_abs, tag = 'smem constant byte address 0x4 - core index']
  #allocation1 [shape = 'u32[144,128]{1,0:T(1,128)}', space=vmem, size = 0x12000, scoped, tag = 'internal scratch']
  %s0 = inlined_call_operand.hbm [shape: f32[16,32], index: 0, kind: input, shape index: {}]
  %s1 = inlined_call_operand.hbm [shape: f32[16,32], index: 1, kind: input, shape index: {}]
  %s2 = inlined_call_operand.hbm [shape: f32[16,32], index: 2, kind: input, shape index: {}]
  %s3 = inlined_call_operand.hbm [shape: f32[32,32], index: 3, kind: input, shape index: {}]
  %s4 = inlined_call_operand.hbm [shape: f32[32,32], index: 4, kind: input, shape index: {}]
  %s5 = inlined_call_operand.hbm [shape: f32[32,32], index: 5, kind: input, shape index: {}]
  %s6 = inlined_call_operand.vmem [shape: f32[1,32], index: 6, kind: input, shape index: {}]
  %s7 = inlined_call_operand.vmem [shape: f32[1,32], index: 7, kind: input, shape index: {}]
  %s8 = inlined_call_operand.vmem [shape: f32[1,32], index: 8, kind: input, shape index: {}]
  %s9 = inlined_call_operand.hbm [shape: f32[2,256], index: 9, kind: output, shape index: {}]
  %s10 = sld [smem:[#allocation0]]
  $region70: #{tpu_custom_call.1} parent=0
    _
  %s12 = ssub.s32 1, %s10
  %s13 = scalar_select 0, %s12, %s10
  $region1: #{tpu_custom_call.1} parent=0
    #allocation2 [shape = 'u8[8192]{0}', space=vmem, size = 0x2000, scoped, tag = 'input window, operand 0, single buffered']
    #allocation3 [shape = 's32[1]{0}', space=sflag, size = 0x4, scoped, tag = 'scoped memory for tpu_custom_call.1']
    #allocation4 [shape = 's32[1]{0}', space=sflag, size = 0x4, scoped, tag = 'scoped memory for tpu_custom_call.1']
    #allocation5 [shape = 'u8[8192]{0}', space=vmem, size = 0x2000, scoped, tag = 'input window, operand 1, single buffered']
    #allocation6 [shape = 's32[1]{0}', space=sflag, size = 0x4, scoped, tag = 'scoped memory for tpu_custom_call.1']
    #allocation7 [shape = 'u8[8192]{0}', space=vmem, size = 0x2000, scoped, tag = 'input window, operand 2, single buffered']
    #allocation8 [shape = 'u8[16384]{0}', space=vmem, size = 0x4000, scoped, tag = 'input window, operand 3, single buffered']
    #allocation9 [shape = 's32[1]{0}', space=sflag, size = 0x4, scoped, tag = 'scoped memory for tpu_custom_call.1']
    #allocation10 [shape = 'u8[16384]{0}', space=vmem, size = 0x4000, scoped, tag = 'input window, operand 4, single buffered']
    #allocation11 [shape = 'u8[16384]{0}', space=vmem, size = 0x4000, scoped, tag = 'input window, operand 5, single buffered']
    #allocation12 [shape = 's32[1]{0}', space=sflag, size = 0x4, scoped, tag = 'scoped memory for tpu_custom_call.1']
    #allocation13 [shape = 'u8[2048]{0}', space=vmem, size = 0x800, scoped, tag = 'output window, operand 0, single buffered']
    %14 = vsyncpa [#allocation3], 0
    %15 = vsyncpa [#allocation6], 0
    %16 = vsyncpa [#allocation9], 0
    %17 = vsyncpa [#allocation12], 0
    %18 = vsyncpa [#allocation4], 0
    // Predicated region
    $region2: #{tpu_custom_call.1} parent=1 // pred_check
      _
    $region3: #{tpu_custom_call.1} parent=1 // pred_check_branch
      %20 = sbr.rel (0) target = $region5
    $region4: #{tpu_custom_call.1} parent=1 // pred_region
      %s22 = ssub.s32 256, 256
      %23 = vsyncadd [#allocation3], %s22
      %s24 = sshll.u32 [#allocation2], 4
      %s25 = int_to_ptr.vmem [resolvable:$true] %s24
      %30 = dma.hbm_to_vmem [thread:$0]  %s0, 256, %s25, [#allocation3], 128, 128, 8
    $region5: #{tpu_custom_call.1} parent=1 // pred_fallthru
      _
    // Predicated region
    $region6: #{tpu_custom_call.1} parent=1 // pred_check
      _
    $region7: #{tpu_custom_call.1} parent=1 // pred_check_branch
      %32 = sbr.rel (0) target = $region9
    $region8: #{tpu_custom_call.1} parent=1 // pred_region
      %s34 = ssub.s32 256, 256
      %35 = vsyncadd [#allocation6], %s34
      %s36 = sshll.u32 [#allocation5], 4
      %s37 = int_to_ptr.vmem [resolvable:$true] %s36
      %42 = dma.hbm_to_vmem [thread:$0]  %s1, 256, %s37, [#allocation6], 128, 128, 8
    $region9: #{tpu_custom_call.1} parent=1 // pred_fallthru
      _
    // Predicated region
    $region10: #{tpu_custom_call.1} parent=1 // pred_check
      _
    $region11: #{tpu_custom_call.1} parent=1 // pred_check_branch
      %44 = sbr.rel (0) target = $region13
    $region12: #{tpu_custom_call.1} parent=1 // pred_region
      %s46 = ssub.s32 256, 256
      %47 = vsyncadd [#allocation6], %s46
      %s48 = sshll.u32 [#allocation7], 4
      %s49 = int_to_ptr.vmem [resolvable:$true] %s48
      %54 = dma.hbm_to_vmem [thread:$0]  %s2, 256, %s49, [#allocation6], 128, 128, 8
    $region13: #{tpu_custom_call.1} parent=1 // pred_fallthru
      _
    // Predicated region
    $region14: #{tpu_custom_call.1} parent=1 // pred_check
      _
    $region15: #{tpu_custom_call.1} parent=1 // pred_check_branch
      %56 = sbr.rel (0) target = $region17
    $region16: #{tpu_custom_call.1} parent=1 // pred_region
      %s58 = ssub.s32 512, 512
      %59 = vsyncadd [#allocation9], %s58
      %s60 = sshll.u32 [#allocation8], 4
      %s61 = int_to_ptr.vmem [resolvable:$true] %s60
      %66 = dma.hbm_to_vmem [thread:$0]  %s3, 512, %s61, [#allocation9], 128, 128, 8
    $region17: #{tpu_custom_call.1} parent=1 // pred_fallthru
      _
    // Predicated region
    $region18: #{tpu_custom_call.1} parent=1 // pred_check
      _
    $region19: #{tpu_custom_call.1} parent=1 // pred_check_branch
      %68 = sbr.rel (0) target = $region21
    $region20: #{tpu_custom_call.1} parent=1 // pred_region
      %s70 = ssub.s32 512, 512
      %71 = vsyncadd [#allocation9], %s70
      %s72 = sshll.u32 [#allocation10], 4
      %s73 = int_to_ptr.vmem [resolvable:$true] %s72
      %78 = dma.hbm_to_vmem [thread:$0]  %s4, 512, %s73, [#allocation9], 128, 128, 8
    $region21: #{tpu_custom_call.1} parent=1 // pred_fallthru
      _
    // Predicated region
    $region22: #{tpu_custom_call.1} parent=1 // pred_check
      _
    $region23: #{tpu_custom_call.1} parent=1 // pred_check_branch
      %80 = sbr.rel (0) target = $region25
    $region24: #{tpu_custom_call.1} parent=1 // pred_region
      %s82 = ssub.s32 512, 512
      %83 = vsyncadd [#allocation12], %s82
      %s84 = sshll.u32 [#allocation11], 4
      %s85 = int_to_ptr.vmem [resolvable:$true] %s84
      %90 = dma.hbm_to_vmem [thread:$0]  %s5, 512, %s85, [#allocation12], 128, 128, 8
    $region25: #{tpu_custom_call.1} parent=1 // pred_fallthru
      _
    // Predicated region
    $region26: #{tpu_custom_call.1} parent=1 // pred_check
      _
    $region27: #{tpu_custom_call.1} parent=1 // pred_check_branch
      %92 = sbr.rel (0) target = $region29
    $region28: #{tpu_custom_call.1} parent=1 // pred_region
      _
    $region29: #{tpu_custom_call.1} parent=1 // pred_fallthru
      _
    // Predicated region
    $region30: #{tpu_custom_call.1} parent=1 // pred_check
      _
    $region31: #{tpu_custom_call.1} parent=1 // pred_check_branch
      %94 = sbr.rel (0) target = $region33
    $region32: #{tpu_custom_call.1} parent=1 // pred_region
      _
    $region33: #{tpu_custom_call.1} parent=1 // pred_fallthru
      _
    // Predicated region
    $region34: #{tpu_custom_call.1} parent=1 // pred_check
      _
    $region35: #{tpu_custom_call.1} parent=1 // pred_check_branch
      %96 = sbr.rel (0) target = $region37
    $region36: #{tpu_custom_call.1} parent=1 // pred_region
      _
    $region37: #{tpu_custom_call.1} parent=1 // pred_fallthru
      _
    // Predicated region
    $region38: #{tpu_custom_call.1} parent=1 // pred_check
      _
    $region39: #{tpu_custom_call.1} parent=1 // pred_check_branch
      %98 = sbr.rel (0) target = $region41
    $region40: #{tpu_custom_call.1} parent=1 // pred_region
      %99 = dma.done [#allocation3], 256
    $region41: #{tpu_custom_call.1} parent=1 // pred_fallthru
      _
    // Predicated region
    $region42: #{tpu_custom_call.1} parent=1 // pred_check
      _
    $region43: #{tpu_custom_call.1} parent=1 // pred_check_branch
      %101 = sbr.rel (0) target = $region45
    $region44: #{tpu_custom_call.1} parent=1 // pred_region
      %102 = dma.done [#allocation6], 256
    $region45: #{tpu_custom_call.1} parent=1 // pred_fallthru
      _
    // Predicated region
    $region46: #{tpu_custom_call.1} parent=1 // pred_check
      _
    $region47: #{tpu_custom_call.1} parent=1 // pred_check_branch
      %104 = sbr.rel (0) target = $region49
    $region48: #{tpu_custom_call.1} parent=1 // pred_region
      %105 = dma.done [#allocation6], 256
    $region49: #{tpu_custom_call.1} parent=1 // pred_fallthru
      _
    // Predicated region
    $region50: #{tpu_custom_call.1} parent=1 // pred_check
      _
    $region51: #{tpu_custom_call.1} parent=1 // pred_check_branch
      %107 = sbr.rel (0) target = $region53
    $region52: #{tpu_custom_call.1} parent=1 // pred_region
      %108 = dma.done [#allocation9], 512
    $region53: #{tpu_custom_call.1} parent=1 // pred_fallthru
      _
    // Predicated region
    $region54: #{tpu_custom_call.1} parent=1 // pred_check
      _
    $region55: #{tpu_custom_call.1} parent=1 // pred_check_branch
      %110 = sbr.rel (0) target = $region57
    $region56: #{tpu_custom_call.1} parent=1 // pred_region
      %111 = dma.done [#allocation9], 512
    $region57: #{tpu_custom_call.1} parent=1 // pred_fallthru
      _
    // Predicated region
    $region58: #{tpu_custom_call.1} parent=1 // pred_check
      _
    $region59: #{tpu_custom_call.1} parent=1 // pred_check_branch
      %113 = sbr.rel (0) target = $region61
    $region60: #{tpu_custom_call.1} parent=1 // pred_region
      %114 = dma.done [#allocation12], 512
    $region61: #{tpu_custom_call.1} parent=1 // pred_fallthru
      _
    %v115 = vld [vmem:[#allocation2] sm:$0xff]
    %v116 = vld [vmem:[#allocation2 + $0x8] sm:$0xff]
    %v117 = vld [vmem:[#allocation5] sm:$0xff]
    %v118 = vld [vmem:[#allocation5 + $0x8] sm:$0xff]
    %v119 = vld [vmem:[#allocation7] sm:$0xff]
    %v120 = vld [vmem:[#allocation7 + $0x8] sm:$0xff]
    %v121 = vld [vmem:[#allocation8] sm:$0xff]
    %v122 = vld [vmem:[#allocation8 + $0x8] sm:$0xff]
    %v123 = vld [vmem:[#allocation8 + $0x10] sm:$0xff]
    %v124 = vld [vmem:[#allocation8 + $0x18] sm:$0xff]
    %v125 = vld [vmem:[#allocation10] sm:$0xff]
    %v126 = vld [vmem:[#allocation10 + $0x8] sm:$0xff]
    %v127 = vld [vmem:[#allocation10 + $0x10] sm:$0xff]
    %v128 = vld [vmem:[#allocation10 + $0x18] sm:$0xff]
    %v129 = vld [vmem:[#allocation11] sm:$0xff]
    %v130 = vld [vmem:[#allocation11 + $0x8] sm:$0xff]
    %v131 = vld [vmem:[#allocation11 + $0x10] sm:$0xff]
    %v132 = vld [vmem:[#allocation11 + $0x18] sm:$0xff]
    %v133 = vld [vmem:[%s6] sm:$0x1]
    %v134 = vld [vmem:[%s7] sm:$0x1]
    %v135 = vld [vmem:[%s8] sm:$0x1]
    %v137 = vlaneseq
    %v138 = vshrl.u32 %v137, 7
    %v139 = vsub.s32 0, %v138
    %v140 = vrot.slane %v133, %v139
    %vm142 = vcmask 261120
    %v144 = vsel %vm142, %v115, 0
    %v147 = vsel %vm142, %v116, 0
    %149 = vmatprep.subr.mxu0 0.0
    %150 = vmatpush1.msra.mxu0 %v121
    %151 = vmatprep.subr.mxu0 0.0
    %152 = vmatpush1.msra.mxu0 %v122
    %153 = vmatprep.subr.mxu0 0.0
    %154 = vmatpush1.msra.mxu0 %v123
    %155 = vmatprep.subr.mxu0 0.0
    %156 = vmatpush1.msra.mxu0 %v124
    %157 = vmatprep.subr.mxu0 0.0
    %158 = vmatpush1.msra.mxu0 0.0
    %159 = vmatprep.subr.mxu0 0.0
    %160 = vmatpush1.msra.mxu0 0.0
    %161 = vmatprep.subr.mxu0 0.0
    %162 = vmatpush1.msra.mxu0 0.0
    %163 = vmatprep.subr.mxu0 0.0
    %164 = vmatpush1.msra.mxu0 0.0
    %165 = vmatprep.subr.mxu0 0.0
    %166 = vmatpush1.msra.mxu0 0.0
    %167 = vmatprep.subr.mxu0 0.0
    %168 = vmatpush1.msra.mxu0 0.0
    %169 = vmatprep.subr.mxu0 0.0
    %170 = vmatpush1.msra.mxu0 0.0
    %171 = vmatprep.subr.mxu0 0.0
    %172 = vmatpush1.msra.mxu0 0.0
    %173 = vmatprep.subr.mxu0 0.0
    %174 = vmatpush1.msra.mxu0 0.0
    %175 = vmatprep.subr.mxu0 0.0
    %176 = vmatpush1.msra.mxu0 0.0
    %177 = vmatprep.subr.mxu0 0.0
    %178 = vmatpush1.msra.mxu0 0.0
    %179 = vmatprep.subr.mxu0 0.0
    %180 = vmatpush1.msra.mxu0 0.0
    %181 = vmatprep.subr.mxu0 0.0
    %182 = vmatpush1.msra.mxu0 0.0
    %183 = vmatprep.subr.mxu0 0.0
    %184 = vmatpush1.msra.mxu0 0.0
    %185 = vmatprep.subr.mxu0 0.0
    %186 = vmatpush1.msra.mxu0 0.0
    %187 = vmatprep.subr.mxu0 0.0
    %188 = vmatpush1.msra.mxu0 0.0
    %189 = vmatprep.subr.mxu0 0.0
    %190 = vmatpush1.msra.mxu0 0.0
    %191 = vmatprep.subr.mxu0 0.0
    %192 = vmatpush1.msra.mxu0 0.0
    %193 = vmatprep.subr.mxu0 0.0
    %194 = vmatpush1.msra.mxu0 0.0
    %195 = vmatprep.subr.mxu0 0.0
    %196 = vmatpush1.msra.mxu0 0.0
    %197 = vmatprep.subr.mxu0 0.0
    %198 = vmatpush1.msra.mxu0 0.0
    %199 = vmatprep.subr.mxu0 0.0
    %200 = vmatpush1.msra.mxu0 0.0
    %201 = vmatprep.subr.mxu0 0.0
    %202 = vmatpush1.msra.mxu0 0.0
    %203 = vmatprep.subr.mxu0 0.0
    %204 = vmatpush1.msra.mxu0 0.0
    %205 = vmatprep.subr.mxu0 0.0
    %206 = vmatpush1.msra.mxu0 0.0
    %207 = vmatprep.subr.mxu0 0.0
    %208 = vmatpush1.msra.mxu0 0.0
    %209 = vmatprep.subr.mxu0 0.0
    %210 = vmatpush1.msra.mxu0 0.0
    %211 = vmatprep.subr.mxu0 0.0
    %212 = vmatpush1.msra.mxu0 0.0
    %213 = vmatprep.mubr.f32.mxu0 0.0
    %214 = vmatmul.mubr.f32.gmra.mrb[0].mxu0 %v144
    %v215 = vpop.f32.mrb[0].mxu0
    %v216 = vadd.f32 %v140, %v215
    %v217 = vpop.f32.mrb[0].mxu0
    %218 = vmatprep.mubr.f32.mxu0 0.0
    %219 = vmatmul.mubr.f32.gmra.mrb[0].mxu0 %v147
    %v220 = vpop.f32.mrb[0].mxu0
    %v221 = vadd.f32 %v140, %v220
    %v222 = vpop.f32.mrb[0].mxu0
    %223 = vdwg.mxu0
    %v225 = vlaneseq
    %v226 = vshrl.u32 %v225, 7
    %v227 = vsub.s32 0, %v226
    %v228 = vrot.slane %v134, %v227
    %v231 = vsel %vm142, %v117, 0
    %v234 = vsel %vm142, %v118, 0
    %236 = vmatprep.subr.mxu0 0.0
    %237 = vmatpush1.msra.mxu0 %v125
    %238 = vmatprep.subr.mxu0 0.0
    %239 = vmatpush1.msra.mxu0 %v126
    %240 = vmatprep.subr.mxu0 0.0
    %241 = vmatpush1.msra.mxu0 %v127
    %242 = vmatprep.subr.mxu0 0.0
    %243 = vmatpush1.msra.mxu0 %v128
    %244 = vmatprep.subr.mxu0 0.0
    %245 = vmatpush1.msra.mxu0 0.0
    %246 = vmatprep.subr.mxu0 0.0
    %247 = vmatpush1.msra.mxu0 0.0
    %248 = vmatprep.subr.mxu0 0.0
    %249 = vmatpush1.msra.mxu0 0.0
    %250 = vmatprep.subr.mxu0 0.0
    %251 = vmatpush1.msra.mxu0 0.0
    %252 = vmatprep.subr.mxu0 0.0
    %253 = vmatpush1.msra.mxu0 0.0
    %254 = vmatprep.subr.mxu0 0.0
    %255 = vmatpush1.msra.mxu0 0.0
    %256 = vmatprep.subr.mxu0 0.0
    %257 = vmatpush1.msra.mxu0 0.0
    %258 = vmatprep.subr.mxu0 0.0
    %259 = vmatpush1.msra.mxu0 0.0
    %260 = vmatprep.subr.mxu0 0.0
    %261 = vmatpush1.msra.mxu0 0.0
    %262 = vmatprep.subr.mxu0 0.0
    %263 = vmatpush1.msra.mxu0 0.0
    %264 = vmatprep.subr.mxu0 0.0
    %265 = vmatpush1.msra.mxu0 0.0
    %266 = vmatprep.subr.mxu0 0.0
    %267 = vmatpush1.msra.mxu0 0.0
    %268 = vmatprep.subr.mxu0 0.0
    %269 = vmatpush1.msra.mxu0 0.0
    %270 = vmatprep.subr.mxu0 0.0
    %271 = vmatpush1.msra.mxu0 0.0
    %272 = vmatprep.subr.mxu0 0.0
    %273 = vmatpush1.msra.mxu0 0.0
    %274 = vmatprep.subr.mxu0 0.0
    %275 = vmatpush1.msra.mxu0 0.0
    %276 = vmatprep.subr.mxu0 0.0
    %277 = vmatpush1.msra.mxu0 0.0
    %278 = vmatprep.subr.mxu0 0.0
    %279 = vmatpush1.msra.mxu0 0.0
    %280 = vmatprep.subr.mxu0 0.0
    %281 = vmatpush1.msra.mxu0 0.0
    %282 = vmatprep.subr.mxu0 0.0
    %283 = vmatpush1.msra.mxu0 0.0
    %284 = vmatprep.subr.mxu0 0.0
    %285 = vmatpush1.msra.mxu0 0.0
    %286 = vmatprep.subr.mxu0 0.0
    %287 = vmatpush1.msra.mxu0 0.0
    %288 = vmatprep.subr.mxu0 0.0
    %289 = vmatpush1.msra.mxu0 0.0
    %290 = vmatprep.subr.mxu0 0.0
    %291 = vmatpush1.msra.mxu0 0.0
    %292 = vmatprep.subr.mxu0 0.0
    %293 = vmatpush1.msra.mxu0 0.0
    %294 = vmatprep.subr.mxu0 0.0
    %295 = vmatpush1.msra.mxu0 0.0
    %296 = vmatprep.subr.mxu0 0.0
    %297 = vmatpush1.msra.mxu0 0.0
    %298 = vmatprep.subr.mxu0 0.0
    %299 = vmatpush1.msra.mxu0 0.0
    %300 = vmatprep.mubr.f32.mxu0 0.0
    %301 = vmatmul.mubr.f32.gmra.mrb[0].mxu0 %v231
    %v302 = vpop.f32.mrb[0].mxu0
    %v303 = vadd.f32 %v228, %v302
    %v304 = vpop.f32.mrb[0].mxu0
    %305 = vmatprep.mubr.f32.mxu0 0.0
    %306 = vmatmul.mubr.f32.gmra.mrb[0].mxu0 %v234
    %v307 = vpop.f32.mrb[0].mxu0
    %v308 = vadd.f32 %v228, %v307
    %v309 = vpop.f32.mrb[0].mxu0
    %310 = vdwg.mxu0
    %v312 = vlaneseq
    %v313 = vshrl.u32 %v312, 7
    %v314 = vsub.s32 0, %v313
    %v315 = vrot.slane %v135, %v314
    %v318 = vsel %vm142, %v119, 0
    %v321 = vsel %vm142, %v120, 0
    %323 = vmatprep.subr.mxu0 0.0
    %324 = vmatpush1.msra.mxu0 %v129
    %325 = vmatprep.subr.mxu0 0.0
    %326 = vmatpush1.msra.mxu0 %v130
    %327 = vmatprep.subr.mxu0 0.0
    %328 = vmatpush1.msra.mxu0 %v131
    %329 = vmatprep.subr.mxu0 0.0
    %330 = vmatpush1.msra.mxu0 %v132
    %331 = vmatprep.subr.mxu0 0.0
    %332 = vmatpush1.msra.mxu0 0.0
    %333 = vmatprep.subr.mxu0 0.0
    %334 = vmatpush1.msra.mxu0 0.0
    %335 = vmatprep.subr.mxu0 0.0
    %336 = vmatpush1.msra.mxu0 0.0
    %337 = vmatprep.subr.mxu0 0.0
    %338 = vmatpush1.msra.mxu0 0.0
    %339 = vmatprep.subr.mxu0 0.0
    %340 = vmatpush1.msra.mxu0 0.0
    %341 = vmatprep.subr.mxu0 0.0
    %342 = vmatpush1.msra.mxu0 0.0
    %343 = vmatprep.subr.mxu0 0.0
    %344 = vmatpush1.msra.mxu0 0.0
    %345 = vmatprep.subr.mxu0 0.0
    %346 = vmatpush1.msra.mxu0 0.0
    %347 = vmatprep.subr.mxu0 0.0
    %348 = vmatpush1.msra.mxu0 0.0
    %349 = vmatprep.subr.mxu0 0.0
    %350 = vmatpush1.msra.mxu0 0.0
    %351 = vmatprep.subr.mxu0 0.0
    %352 = vmatpush1.msra.mxu0 0.0
    %353 = vmatprep.subr.mxu0 0.0
    %354 = vmatpush1.msra.mxu0 0.0
    %355 = vmatprep.subr.mxu0 0.0
    %356 = vmatpush1.msra.mxu0 0.0
    %357 = vmatprep.subr.mxu0 0.0
    %358 = vmatpush1.msra.mxu0 0.0
    %359 = vmatprep.subr.mxu0 0.0
    %360 = vmatpush1.msra.mxu0 0.0
    %361 = vmatprep.subr.mxu0 0.0
    %362 = vmatpush1.msra.mxu0 0.0
    %363 = vmatprep.subr.mxu0 0.0
    %364 = vmatpush1.msra.mxu0 0.0
    %365 = vmatprep.subr.mxu0 0.0
    %366 = vmatpush1.msra.mxu0 0.0
    %367 = vmatprep.subr.mxu0 0.0
    %368 = vmatpush1.msra.mxu0 0.0
    %369 = vmatprep.subr.mxu0 0.0
    %370 = vmatpush1.msra.mxu0 0.0
    %371 = vmatprep.subr.mxu0 0.0
    %372 = vmatpush1.msra.mxu0 0.0
    %373 = vmatprep.subr.mxu0 0.0
    %374 = vmatpush1.msra.mxu0 0.0
    %375 = vmatprep.subr.mxu0 0.0
    %376 = vmatpush1.msra.mxu0 0.0
    %377 = vmatprep.subr.mxu0 0.0
    %378 = vmatpush1.msra.mxu0 0.0
    %379 = vmatprep.subr.mxu0 0.0
    %380 = vmatpush1.msra.mxu0 0.0
    %381 = vmatprep.subr.mxu0 0.0
    %382 = vmatpush1.msra.mxu0 0.0
    %383 = vmatprep.subr.mxu0 0.0
    %384 = vmatpush1.msra.mxu0 0.0
    %385 = vmatprep.subr.mxu0 0.0
    %386 = vmatpush1.msra.mxu0 0.0
    %387 = vmatprep.mubr.f32.mxu0 0.0
    %388 = vmatmul.mubr.f32.gmra.mrb[0].mxu0 %v318
    %v389 = vpop.f32.mrb[0].mxu0
    %v390 = vadd.f32 %v315, %v389
    %v391 = vpop.f32.mrb[0].mxu0
    %392 = vmatprep.mubr.f32.mxu0 0.0
    %393 = vmatmul.mubr.f32.gmra.mrb[0].mxu0 %v321
    %v394 = vpop.f32.mrb[0].mxu0
    %v395 = vadd.f32 %v315, %v394
    %v396 = vpop.f32.mrb[0].mxu0
    %397 = vdwg.mxu0
    %v398 = vmul.f32 %v216, 0.03125
    %v399 = vmul.f32 %v221, 0.03125
    %v401 = vsel %vm142, %v398, 0
    %v404 = vsel %vm142, %v303, 0
    %406 = vmatprep.subr.mxu0 0.0
    %407 = vmatpush1.xpose.msra.mxu0 %v404
    %408 = vmatprep.subr.mxu0 0.0
    %409 = vmatpush1.xpose.msra.mxu0 0.0
    %410 = vmatprep.subr.mxu0 0.0
    %411 = vmatpush1.xpose.msra.mxu0 0.0
    %412 = vmatprep.subr.mxu0 0.0
    %413 = vmatpush1.xpose.msra.mxu0 0.0
    %414 = vmatprep.subr.mxu0 0.0
    %415 = vmatpush1.xpose.msra.mxu0 0.0
    %416 = vmatprep.subr.mxu0 0.0
    %417 = vmatpush1.xpose.msra.mxu0 0.0
    %418 = vmatprep.subr.mxu0 0.0
    %419 = vmatpush1.xpose.msra.mxu0 0.0
    %420 = vmatprep.subr.mxu0 0.0
    %421 = vmatpush1.xpose.msra.mxu0 0.0
    %422 = vmatprep.subr.mxu0 0.0
    %423 = vmatpush1.xpose.msra.mxu0 0.0
    %424 = vmatprep.subr.mxu0 0.0
    %425 = vmatpush1.xpose.msra.mxu0 0.0
    %426 = vmatprep.subr.mxu0 0.0
    %427 = vmatpush1.xpose.msra.mxu0 0.0
    %428 = vmatprep.subr.mxu0 0.0
    %429 = vmatpush1.xpose.msra.mxu0 0.0
    %430 = vmatprep.subr.mxu0 0.0
    %431 = vmatpush1.xpose.msra.mxu0 0.0
    %432 = vmatprep.subr.mxu0 0.0
    %433 = vmatpush1.xpose.msra.mxu0 0.0
    %434 = vmatprep.subr.mxu0 0.0
    %435 = vmatpush1.xpose.msra.mxu0 0.0
    %436 = vmatprep.subr.mxu0 0.0
    %437 = vmatpush1.xpose.msra.mxu0 0.0
    %438 = vmatprep.subr.mxu0 0.0
    %439 = vmatpush1.xpose.msra.mxu0 0.0
    %440 = vmatprep.subr.mxu0 0.0
    %441 = vmatpush1.xpose.msra.mxu0 0.0
    %442 = vmatprep.subr.mxu0 0.0
    %443 = vmatpush1.xpose.msra.mxu0 0.0
    %444 = vmatprep.subr.mxu0 0.0
    %445 = vmatpush1.xpose.msra.mxu0 0.0
    %446 = vmatprep.subr.mxu0 0.0
    %447 = vmatpush1.xpose.msra.mxu0 0.0
    %448 = vmatprep.subr.mxu0 0.0
    %449 = vmatpush1.xpose.msra.mxu0 0.0
    %450 = vmatprep.subr.mxu0 0.0
    %451 = vmatpush1.xpose.msra.mxu0 0.0
    %452 = vmatprep.subr.mxu0 0.0
    %453 = vmatpush1.xpose.msra.mxu0 0.0
    %454 = vmatprep.subr.mxu0 0.0
    %455 = vmatpush1.xpose.msra.mxu0 0.0
    %456 = vmatprep.subr.mxu0 0.0
    %457 = vmatpush1.xpose.msra.mxu0 0.0
    %458 = vmatprep.subr.mxu0 0.0
    %459 = vmatpush1.xpose.msra.mxu0 0.0
    %460 = vmatprep.subr.mxu0 0.0
    %461 = vmatpush1.xpose.msra.mxu0 0.0
    %462 = vmatprep.subr.mxu0 0.0
    %463 = vmatpush1.xpose.msra.mxu0 0.0
    %464 = vmatprep.subr.mxu0 0.0
    %465 = vmatpush1.xpose.msra.mxu0 0.0
    %466 = vmatprep.subr.mxu0 0.0
    %467 = vmatpush1.xpose.msra.mxu0 0.0
    %468 = vmatprep.subr.mxu0 0.0
    %469 = vmatpush1.xpose.msra.mxu0 0.0
    %470 = vmatprep.mubr.f32.mxu0 0.0
    %471 = vmatmul.mubr.f32.gmra.mrb[0].mxu0 %v401
    %v472 = vpop.f32.mrb[0].mxu0
    %v473 = vadd.f32 0.0, %v472
    %v474 = vpop.f32.mrb[0].mxu0
    %475 = vdwg.mxu0
    %v477 = vsel %vm142, %v399, 0
    %v480 = vsel %vm142, %v308, 0
    %482 = vmatprep.subr.mxu0 0.0
    %483 = vmatpush1.xpose.msra.mxu0 %v480
    %484 = vmatprep.subr.mxu0 0.0
    %485 = vmatpush1.xpose.msra.mxu0 0.0
    %486 = vmatprep.subr.mxu0 0.0
    %487 = vmatpush1.xpose.msra.mxu0 0.0
    %488 = vmatprep.subr.mxu0 0.0
    %489 = vmatpush1.xpose.msra.mxu0 0.0
    %490 = vmatprep.subr.mxu0 0.0
    %491 = vmatpush1.xpose.msra.mxu0 0.0
    %492 = vmatprep.subr.mxu0 0.0
    %493 = vmatpush1.xpose.msra.mxu0 0.0
    %494 = vmatprep.subr.mxu0 0.0
    %495 = vmatpush1.xpose.msra.mxu0 0.0
    %496 = vmatprep.subr.mxu0 0.0
    %497 = vmatpush1.xpose.msra.mxu0 0.0
    %498 = vmatprep.subr.mxu0 0.0
    %499 = vmatpush1.xpose.msra.mxu0 0.0
    %500 = vmatprep.subr.mxu0 0.0
    %501 = vmatpush1.xpose.msra.mxu0 0.0
    %502 = vmatprep.subr.mxu0 0.0
    %503 = vmatpush1.xpose.msra.mxu0 0.0
    %504 = vmatprep.subr.mxu0 0.0
    %505 = vmatpush1.xpose.msra.mxu0 0.0
    %506 = vmatprep.subr.mxu0 0.0
    %507 = vmatpush1.xpose.msra.mxu0 0.0
    %508 = vmatprep.subr.mxu0 0.0
    %509 = vmatpush1.xpose.msra.mxu0 0.0
    %510 = vmatprep.subr.mxu0 0.0
    %511 = vmatpush1.xpose.msra.mxu0 0.0
    %512 = vmatprep.subr.mxu0 0.0
    %513 = vmatpush1.xpose.msra.mxu0 0.0
    %514 = vmatprep.subr.mxu0 0.0
    %515 = vmatpush1.xpose.msra.mxu0 0.0
    %516 = vmatprep.subr.mxu0 0.0
    %517 = vmatpush1.xpose.msra.mxu0 0.0
    %518 = vmatprep.subr.mxu0 0.0
    %519 = vmatpush1.xpose.msra.mxu0 0.0
    %520 = vmatprep.subr.mxu0 0.0
    %521 = vmatpush1.xpose.msra.mxu0 0.0
    %522 = vmatprep.subr.mxu0 0.0
    %523 = vmatpush1.xpose.msra.mxu0 0.0
    %524 = vmatprep.subr.mxu0 0.0
    %525 = vmatpush1.xpose.msra.mxu0 0.0
    %526 = vmatprep.subr.mxu0 0.0
    %527 = vmatpush1.xpose.msra.mxu0 0.0
    %528 = vmatprep.subr.mxu0 0.0
    %529 = vmatpush1.xpose.msra.mxu0 0.0
    %530 = vmatprep.subr.mxu0 0.0
    %531 = vmatpush1.xpose.msra.mxu0 0.0
    %532 = vmatprep.subr.mxu0 0.0
    %533 = vmatpush1.xpose.msra.mxu0 0.0
    %534 = vmatprep.subr.mxu0 0.0
    %535 = vmatpush1.xpose.msra.mxu0 0.0
    %536 = vmatprep.subr.mxu0 0.0
    %537 = vmatpush1.xpose.msra.mxu0 0.0
    %538 = vmatprep.subr.mxu0 0.0
    %539 = vmatpush1.xpose.msra.mxu0 0.0
    %540 = vmatprep.subr.mxu0 0.0
    %541 = vmatpush1.xpose.msra.mxu0 0.0
    %542 = vmatprep.subr.mxu0 0.0
    %543 = vmatpush1.xpose.msra.mxu0 0.0
    %544 = vmatprep.subr.mxu0 0.0
    %545 = vmatpush1.xpose.msra.mxu0 0.0
    %546 = vmatprep.mubr.f32.mxu0 0.0
    %547 = vmatmul.mubr.f32.gmra.mrb[0].mxu0 %v477
    %v548 = vpop.f32.mrb[0].mxu0
    %v549 = vadd.f32 0.0, %v548
    %v550 = vpop.f32.mrb[0].mxu0
    %551 = vdwg.mxu0
    %vm552 = vcmask 64512
    %v553 = vsel %vm552, %v473, -inf
    %v554 = vsel %vm552, %v549, -inf
    %v555 = vmax.f32 %v553, %v554
    %v556 = vsub.f32 %v473, %v555
    %v557 = vsub.f32 %v549, %v555
    %v558 = vmul.f32 %v556, 1.442695
    %v559 = vpow.pop %v558
    %v560 = vmul.f32 %v557, 1.442695
    %v561 = vpow.pop %v560
    %v562 = vsel %vm552, %v559, 0.0
    %v563 = vsel %vm552, %v561, 0.0
    %v564 = vadd.f32 %v562, %v563
    %v565 = vrcp.pop %v564
    %v566 = vmul.f32 %v559, %v565
    %v567 = vmul.f32 %v561, %v565
    %v569 = vsel %vm552, %v566, 0
    %571 = vmatprep.subr.mxu0 0.0
    %572 = vmatpush1.msra.mxu0 %v390
    %573 = vmatprep.subr.mxu0 0.0
    %574 = vmatpush1.msra.mxu0 0.0
    %575 = vmatprep.subr.mxu0 0.0
    %576 = vmatpush1.msra.mxu0 0.0
    %577 = vmatprep.subr.mxu0 0.0
    %578 = vmatpush1.msra.mxu0 0.0
    %579 = vmatprep.subr.mxu0 0.0
    %580 = vmatpush1.msra.mxu0 0.0
    %581 = vmatprep.subr.mxu0 0.0
    %582 = vmatpush1.msra.mxu0 0.0
    %583 = vmatprep.subr.mxu0 0.0
    %584 = vmatpush1.msra.mxu0 0.0
    %585 = vmatprep.subr.mxu0 0.0
    %586 = vmatpush1.msra.mxu0 0.0
    %587 = vmatprep.subr.mxu0 0.0
    %588 = vmatpush1.msra.mxu0 0.0
    %589 = vmatprep.subr.mxu0 0.0
    %590 = vmatpush1.msra.mxu0 0.0
    %591 = vmatprep.subr.mxu0 0.0
    %592 = vmatpush1.msra.mxu0 0.0
    %593 = vmatprep.subr.mxu0 0.0
    %594 = vmatpush1.msra.mxu0 0.0
    %595 = vmatprep.subr.mxu0 0.0
    %596 = vmatpush1.msra.mxu0 0.0
    %597 = vmatprep.subr.mxu0 0.0
    %598 = vmatpush1.msra.mxu0 0.0
    %599 = vmatprep.subr.mxu0 0.0
    %600 = vmatpush1.msra.mxu0 0.0
    %601 = vmatprep.subr.mxu0 0.0
    %602 = vmatpush1.msra.mxu0 0.0
    %603 = vmatprep.subr.mxu0 0.0
    %604 = vmatpush1.msra.mxu0 0.0
    %605 = vmatprep.subr.mxu0 0.0
    %606 = vmatpush1.msra.mxu0 0.0
    %607 = vmatprep.subr.mxu0 0.0
    %608 = vmatpush1.msra.mxu0 0.0
    %609 = vmatprep.subr.mxu0 0.0
    %610 = vmatpush1.msra.mxu0 0.0
    %611 = vmatprep.subr.mxu0 0.0
    %612 = vmatpush1.msra.mxu0 0.0
    %613 = vmatprep.subr.mxu0 0.0
    %614 = vmatpush1.msra.mxu0 0.0
    %615 = vmatprep.subr.mxu0 0.0
    %616 = vmatpush1.msra.mxu0 0.0
    %617 = vmatprep.subr.mxu0 0.0
    %618 = vmatpush1.msra.mxu0 0.0
    %619 = vmatprep.subr.mxu0 0.0
    %620 = vmatpush1.msra.mxu0 0.0
    %621 = vmatprep.subr.mxu0 0.0
    %622 = vmatpush1.msra.mxu0 0.0
    %623 = vmatprep.subr.mxu0 0.0
    %624 = vmatpush1.msra.mxu0 0.0
    %625 = vmatprep.subr.mxu0 0.0
    %626 = vmatpush1.msra.mxu0 0.0
    %627 = vmatprep.subr.mxu0 0.0
    %628 = vmatpush1.msra.mxu0 0.0
    %629 = vmatprep.subr.mxu0 0.0
    %630 = vmatpush1.msra.mxu0 0.0
    %631 = vmatprep.subr.mxu0 0.0
    %632 = vmatpush1.msra.mxu0 0.0
    %633 = vmatprep.subr.mxu0 0.0
    %634 = vmatpush1.msra.mxu0 0.0
    %635 = vmatprep.mubr.f32.mxu0 0.0
    %636 = vmatmul.mubr.f32.gmra.mrb[0].mxu0 %v569
    %v637 = vpop.f32.mrb[0].mxu0
    %v638 = vadd.f32 0.0, %v637
    %v639 = vpop.f32.mrb[0].mxu0
    %640 = vdwg.mxu0
    %v642 = vsel %vm552, %v567, 0
    %644 = vmatprep.subr.mxu0 0.0
    %645 = vmatpush1.msra.mxu0 %v395
    %646 = vmatprep.subr.mxu0 0.0
    %647 = vmatpush1.msra.mxu0 0.0
    %648 = vmatprep.subr.mxu0 0.0
    %649 = vmatpush1.msra.mxu0 0.0
    %650 = vmatprep.subr.mxu0 0.0
    %651 = vmatpush1.msra.mxu0 0.0
    %652 = vmatprep.subr.mxu0 0.0
    %653 = vmatpush1.msra.mxu0 0.0
    %654 = vmatprep.subr.mxu0 0.0
    %655 = vmatpush1.msra.mxu0 0.0
    %656 = vmatprep.subr.mxu0 0.0
    %657 = vmatpush1.msra.mxu0 0.0
    %658 = vmatprep.subr.mxu0 0.0
    %659 = vmatpush1.msra.mxu0 0.0
    %660 = vmatprep.subr.mxu0 0.0
    %661 = vmatpush1.msra.mxu0 0.0
    %662 = vmatprep.subr.mxu0 0.0
    %663 = vmatpush1.msra.mxu0 0.0
    %664 = vmatprep.subr.mxu0 0.0
    %665 = vmatpush1.msra.mxu0 0.0
    %666 = vmatprep.subr.mxu0 0.0
    %667 = vmatpush1.msra.mxu0 0.0
    %668 = vmatprep.subr.mxu0 0.0
    %669 = vmatpush1.msra.mxu0 0.0
    %670 = vmatprep.subr.mxu0 0.0
    %671 = vmatpush1.msra.mxu0 0.0
    %672 = vmatprep.subr.mxu0 0.0
    %673 = vmatpush1.msra.mxu0 0.0
    %674 = vmatprep.subr.mxu0 0.0
    %675 = vmatpush1.msra.mxu0 0.0
    %676 = vmatprep.subr.mxu0 0.0
    %677 = vmatpush1.msra.mxu0 0.0
    %678 = vmatprep.subr.mxu0 0.0
    %679 = vmatpush1.msra.mxu0 0.0
    %680 = vmatprep.subr.mxu0 0.0
    %681 = vmatpush1.msra.mxu0 0.0
    %682 = vmatprep.subr.mxu0 0.0
    %683 = vmatpush1.msra.mxu0 0.0
    %684 = vmatprep.subr.mxu0 0.0
    %685 = vmatpush1.msra.mxu0 0.0
    %686 = vmatprep.subr.mxu0 0.0
    %687 = vmatpush1.msra.mxu0 0.0
    %688 = vmatprep.subr.mxu0 0.0
    %689 = vmatpush1.msra.mxu0 0.0
    %690 = vmatprep.subr.mxu0 0.0
    %691 = vmatpush1.msra.mxu0 0.0
    %692 = vmatprep.subr.mxu0 0.0
    %693 = vmatpush1.msra.mxu0 0.0
    %694 = vmatprep.subr.mxu0 0.0
    %695 = vmatpush1.msra.mxu0 0.0
    %696 = vmatprep.subr.mxu0 0.0
    %697 = vmatpush1.msra.mxu0 0.0
    %698 = vmatprep.subr.mxu0 0.0
    %699 = vmatpush1.msra.mxu0 0.0
    %700 = vmatprep.subr.mxu0 0.0
    %701 = vmatpush1.msra.mxu0 0.0
    %702 = vmatprep.subr.mxu0 0.0
    %703 = vmatpush1.msra.mxu0 0.0
    %704 = vmatprep.subr.mxu0 0.0
    %705 = vmatpush1.msra.mxu0 0.0
    %706 = vmatprep.subr.mxu0 0.0
    %707 = vmatpush1.msra.mxu0 0.0
    %708 = vmatprep.mubr.f32.mxu0 0.0
    %709 = vmatmul.mubr.f32.gmra.mrb[0].mxu0 %v642
    %v710 = vpop.f32.mrb[0].mxu0
    %v711 = vadd.f32 0.0, %v710
    %v712 = vpop.f32.mrb[0].mxu0
    %713 = vdwg.mxu0
    %v714 = vcombine.high %v638, 0.0
    %v716 = vunpack.c.l.s4 1983009808
    %v717 = vunpack.c.0.s8 %v716
    %v718 = vlaneseq
    %v719 = vshrl.u32 %v718, 7
    %v720 = vsub.s32 %v717, %v719
    %v721 = vrot.slane %v638, %v720
    %v723 = vunpack.c.l.s4 1983009808
    %v724 = vunpack.c.0.s8 %v723
    %v725 = vlaneseq
    %v726 = vshrl.u32 %v725, 7
    %v727 = vsub.s32 %v724, %v726
    %v728 = vrot.slane %v714, %v727
    %v729 = vcombine.high %v711, 0.0
    %v731 = vunpack.c.l.s4 1983009808
    %v732 = vunpack.c.0.s8 %v731
    %v733 = vlaneseq
    %v734 = vshrl.u32 %v733, 7
    %v735 = vsub.s32 %v732, %v734
    %v736 = vrot.slane %v711, %v735
    %v738 = vunpack.c.l.s4 1983009808
    %v739 = vunpack.c.0.s8 %v738
    %v740 = vlaneseq
    %v741 = vshrl.u32 %v740, 7
    %v742 = vsub.s32 %v739, %v741
    %v743 = vrot.slane %v729, %v742
    %v744 = vcombine.low %v721, %v736
    %v745 = vcombine.high %v721, %v736
    %v747 = vunpack.c.l.s4 1934713408
    %v748 = vunpack.c.0.s8 %v747
    %v749 = vlaneseq
    %v750 = vshrl.u32 %v749, 7
    %v751 = vsub.s32 %v748, %v750
    %v752 = vrot.slane %v744, %v751
    %v754 = vunpack.c.l.s4 1934713408
    %v755 = vunpack.c.0.s8 %v754
    %v756 = vlaneseq
    %v757 = vshrl.u32 %v756, 7
    %v758 = vsub.s32 %v755, %v757
    %v759 = vrot.slane %v745, %v758
    %v760 = vcombine.low %v728, %v743
    %v761 = vcombine.high %v728, %v743
    %v763 = vunpack.c.l.s4 1934713408
    %v764 = vunpack.c.0.s8 %v763
    %v765 = vlaneseq
    %v766 = vshrl.u32 %v765, 7
    %v767 = vsub.s32 %v764, %v766
    %v768 = vrot.slane %v760, %v767
    %v770 = vunpack.c.l.s4 1934713408
    %v771 = vunpack.c.0.s8 %v770
    %v772 = vlaneseq
    %v773 = vshrl.u32 %v772, 7
    %v774 = vsub.s32 %v771, %v773
    %v775 = vrot.slane %v761, %v774
    %v776 = vcombine.high %v752, 0.0
    %v777 = vcombine.high %v759, 0.0
    %v778 = vcombine.high %v768, 0.0
    %v779 = vcombine.high %v775, 0.0
    %781 = vrot.lane.b32.xlu0 %v776, 32
    %v782 = vpop.permute.xlu0 %781
    %785 = vrot.lane.b32.xlu0 %v759, 64
    %v786 = vpop.permute.xlu0 %785
    %789 = vrot.lane.b32.xlu0 %v777, 96
    %v790 = vpop.permute.xlu0 %789
    %793 = vrot.lane.b32.xlu0 %v778, 32
    %v794 = vpop.permute.xlu0 %793
    %797 = vrot.lane.b32.xlu0 %v775, 64
    %v798 = vpop.permute.xlu0 %797
    %801 = vrot.lane.b32.xlu0 %v779, 96
    %v802 = vpop.permute.xlu0 %801
    %v804 = vsel %vm142, %v752, %v782
    %vm805 = vcmask 523264
    %v806 = vsel %vm805, %v804, %v786
    %vm807 = vcmask 785408
    %v808 = vsel %vm807, %v806, %v790
    %v809 = vsel %vm142, %v768, %v794
    %v810 = vsel %vm805, %v809, %v798
    %v811 = vsel %vm807, %v810, %v802
    %v814 = vcombine.low %v808, %v811
    %v816 = vunpack.c.l.s4 1983009808
    %v817 = vunpack.c.0.s8 %v816
    %v818 = vlaneseq
    %v819 = vshrl.u32 %v818, 7
    %v820 = vsub.s32 %v817, %v819
    %v821 = vrot.slane %v814, %v820
    %823 = vst [vmem:[#allocation13] sm:$0xf] %v821
    // Predicated region
    $region62: #{tpu_custom_call.1} parent=1 // pred_check
      _
    $region63: #{tpu_custom_call.1} parent=1 // pred_check_branch
      %825 = sbr.rel (0) target = $region65
    $region64: #{tpu_custom_call.1} parent=1 // pred_region
      %s827 = ssub.s32 64, 64
      %828 = vsyncadd [#allocation4], %s827
      %s830 = sshll.u32 [#allocation13], 4
      %s831 = int_to_ptr.vmem [resolvable:$true] %s830
      %833 = dma.vmem_to_hbm [thread:$0]  %s831, 64, %s9, [#allocation4]
    $region65: #{tpu_custom_call.1} parent=1 // pred_fallthru
      _
    // Predicated region
    $region66: #{tpu_custom_call.1} parent=1 // pred_check
      _
    $region67: #{tpu_custom_call.1} parent=1 // pred_check_branch
      %835 = sbr.rel (0) target = $region69
    $region68: #{tpu_custom_call.1} parent=1 // pred_region
      %836 = dma.done [#allocation4], 64
    $region69: #{tpu_custom_call.1} parent=1 // pred_fallthru
      _
    %837 = vsyncpa [#allocation3], 1
    %838 = vsyncpa [#allocation6], 1
    %839 = vsyncpa [#allocation9], 1
    %840 = vsyncpa [#allocation12], 1
    %841 = vsyncpa [#allocation4], 1

</llo_original>
